<compile_context>
chip_gen: v5e
topology: v5e:2x2
jax: 0.10.0
libtpu: 0.0.40
codegen_flags: <defaults>
</compile_context>

<pallas_src>
import functools
import math

import jax
import jax.numpy as jnp
from jax import lax
from jax.experimental import pallas as pl
from jax.experimental.pallas import tpu as pltpu


_WEIGHT_DTYPE = jnp.bfloat16   # matmul weights stored in HBM as bf16
_MM_DTYPE = jnp.bfloat16       # matmul operand dtype (accumulation stays f32)
# TODO(synk): also carry inter-kernel activations in bf16 to halve activation
# HBM traffic on the mem-bound conv / GN path (kept f32 here for accuracy).


def _vmem_limit_bytes():
    """Per-chip scoped-VMEM limit (~75% of capacity), with a safe fallback."""
    try:
        info = pltpu.get_tpu_info()
        cap = getattr(info, "vmem_capacity_bytes", None)
        if cap:
            return int(min(cap * 3 // 4, 100 * 1024 * 1024))
    except Exception:
        pass
    return 64 * 1024 * 1024


_VMEM_LIMIT = _vmem_limit_bytes()


def _largest_divisor(n, max_val):
    t = max(1, min(n, max_val))
    while t > 1 and n % t != 0:
        t -= 1
    return t


# ---------------------------------------------------------------------------
# Kernels
# ---------------------------------------------------------------------------
def _linear_kernel(*refs, silu_in, has_add, mm_dtype):
    if has_add:
        a_ref, w_ref, b_ref, add_ref, o_ref = refs
    else:
        a_ref, w_ref, b_ref, o_ref = refs
        add_ref = None
    a = a_ref[...].astype(jnp.float32)
    if silu_in:
        a = a * jax.nn.sigmoid(a)
    out = jnp.dot(a.astype(mm_dtype), w_ref[...].astype(mm_dtype),
                  preferred_element_type=jnp.float32)
    out = out + b_ref[...].astype(jnp.float32)
    if has_add:
        out = out + add_ref[...].astype(jnp.float32)
    o_ref[...] = out.astype(o_ref.dtype)


def _conv3d_kernel(xm_ref, h0_ref, h1_ref, w_ref, b_ref, *rest,
                   H, W, td, add_mode, mm_dtype):
    """One (sample, depth-tile) step: all 27 taps, all td output depths."""
    if add_mode == "none":
        (o_ref,) = rest
        add_ref = None
    else:
        add_ref, o_ref = rest

    HW = H * W
    accs = [None] * td

    def slab_windows(slab):
        # slab: (Hp, Wp, Cin).  kw slice (sublane-misaligned) hoisted out of
        # the kh loop -> 3 relayout copies per slab instead of 9.
        wins = {}
        for kw in range(3):
            col = slab[:, kw:kw + W, :]                       # (Hp, W, Cin)
            for kh in range(3):
                wins[(kh, kw)] = (col[kh:kh + H, :, :]
                                  .reshape(HW, -1).astype(mm_dtype))
        return wins

    for z in range(td + 2):                    # padded-depth index in block
        if z < td:
            slab = xm_ref[z]
        elif z == td:
            slab = h0_ref[...]
        else:
            slab = h1_ref[...]
        wins = slab_windows(slab)              # shared across the 3 depth taps
        for kd in range(3):
            od = z - kd                        # output depth using this slab
            if 0 <= od < td:
                for kh in range(3):
                    for kw in range(3):
                        wmat = w_ref[kd, kh * 3 + kw].astype(mm_dtype)
                        part = jnp.dot(wins[(kh, kw)], wmat,
                                       preferred_element_type=jnp.float32)
                        accs[od] = part if accs[od] is None else accs[od] + part

    bias = b_ref[...].astype(jnp.float32)                     # (1, Cout)
    for od in range(td):
        res = accs[od] + bias
        if add_mode == "bcast":
            res = res + add_ref[...].astype(jnp.float32)      # (1, Cout)
        elif add_mode == "row":
            res = res + add_ref[od].astype(jnp.float32)       # (HW, Cout)
        o_ref[od] = res.astype(o_ref.dtype)


def _gn_stats_kernel(x_ref, cg_ref, stats_ref, acc_ref, *, s_total, ts):
    si = pl.program_id(1)

    @pl.when(si == 0)
    def _():
        acc_ref[...] = jnp.zeros_like(acc_ref)

    x = x_ref[...].astype(jnp.float32)                        # (ts, C)
    idx = si * ts + lax.broadcasted_iota(jnp.int32, x.shape, 0)
    x = jnp.where(idx < s_total, x, 0.0)                      # ragged-tail mask
    s1 = jnp.sum(x, axis=0, keepdims=True)                    # (1, C)
    s2 = jnp.sum(x * x, axis=0, keepdims=True)                # (1, C)
    mom = jnp.concatenate([s1, s2], axis=0)                   # (2, C)
    # group reduce via tiny one-hot matmul (no lane-axis reshapes)
    acc_ref[...] += jnp.dot(mom, cg_ref[...],
                            preferred_element_type=jnp.float32)   # (2, G)

    @pl.when(si == pl.num_programs(1) - 1)
    def _():
        stats_ref[...] = acc_ref[...]


def _gn_apply_kernel(x_ref, stats_ref, gc_ref, gamma_ref, beta_ref, o_ref, *,
                     eps, silu, inv_count):
    # TODO(synk): switch the stats pass to a shifted/Welford accumulation if
    # E[x^2]-E[x]^2 precision ever becomes an issue at large activations.
    x = x_ref[...].astype(jnp.float32)                        # (ts, C)
    st = stats_ref[...]                                       # (2, G)
    mean_g = st[0:1] * inv_count
    var_g = st[1:2] * inv_count - mean_g * mean_g
    inv_g = lax.rsqrt(var_g + eps)
    gc = gc_ref[...]
    mean_c = jnp.dot(mean_g, gc, preferred_element_type=jnp.float32)  # (1, C)
    inv_c = jnp.dot(inv_g, gc, preferred_element_type=jnp.float32)    # (1, C)
    y = (x - mean_c) * inv_c * gamma_ref[...] + beta_ref[...]
    if silu:
        y = y * jax.nn.sigmoid(y)
    o_ref[...] = y.astype(o_ref.dtype)


def _mha_flash_kernel(q_ref, k_ref, v_ref, o_ref, m_sc, l_sc, acc_sc, *,
                      num_heads, head_dim, scale, sk_total, tk, mm_dtype):
    ki = pl.program_id(2)

    @pl.when(ki == 0)
    def _():
        m_sc[...] = jnp.full(m_sc.shape, -jnp.inf, dtype=jnp.float32)
        l_sc[...] = jnp.zeros(l_sc.shape, dtype=jnp.float32)
        acc_sc[...] = jnp.zeros(acc_sc.shape, dtype=jnp.float32)

    # fold 1/sqrt(Dh) into q once per block (not per head per kv step)
    q = (q_ref[...].astype(jnp.float32) * scale).astype(mm_dtype)   # (tq, C)
    k = k_ref[...].astype(mm_dtype)                                 # (tk, C)
    v = v_ref[...].astype(mm_dtype)                                 # (tk, C)

    kidx = ki * tk + lax.broadcasted_iota(jnp.int32, (1, tk), 1)
    kmask = kidx < sk_total                                          # (1, tk)

    # TODO(synk): for Dh < 128 a head-blocked (B*nh, S, Dh) layout would fill
    # the MXU contraction better; packed-heads kept here for lane-dense output.
    for h in range(num_heads):
        lo, hi = h * head_dim, (h + 1) * head_dim
        qh, kh, vh = q[:, lo:hi], k[:, lo:hi], v[:, lo:hi]
        s = jnp.dot(qh, kh.T, preferred_element_type=jnp.float32)   # (tq, tk)
        s = jnp.where(kmask, s, -jnp.inf)
        m_prev = m_sc[h]                                             # (tq, 1)
        m_new = jnp.maximum(m_prev, jnp.max(s, axis=-1, keepdims=True))
        alpha = jnp.exp(m_prev - m_new)
        p = jnp.exp(s - m_new)
        l_sc[h] = alpha * l_sc[h] + jnp.sum(p, axis=-1, keepdims=True)
        acc_sc[h] = alpha * acc_sc[h] + jnp.dot(
            p.astype(mm_dtype), vh, preferred_element_type=jnp.float32)
        m_sc[h] = m_new

    @pl.when(ki == pl.num_programs(2) - 1)
    def _():
        # exact reciprocal: epilogue-only cost, avoids approx-softmax error
        outs = [acc_sc[h] * pl.reciprocal(l_sc[h], approx=False)
                for h in range(num_heads)]
        o_ref[...] = jnp.concatenate(outs, axis=-1).astype(o_ref.dtype)


# ---------------------------------------------------------------------------
# Wrappers
# ---------------------------------------------------------------------------
def linear(a, w, b, *, silu_in=False, add=None, row_tile=512):
    """a: (M, K); w: (K, N) bf16; b: (N,); optional fused residual add (M, N)."""
    M, K = a.shape
    N = w.shape[1]
    tm = M if M <= row_tile else row_tile          # ragged tail masked by Pallas
    grid = (pl.cdiv(M, tm),)
    kern = functools.partial(_linear_kernel, silu_in=silu_in,
                             has_add=add is not None, mm_dtype=_MM_DTYPE)
    in_specs = [
        pl.BlockSpec((tm, K), lambda i: (i, 0)),
        pl.BlockSpec((K, N), lambda i: (0, 0)),    # constant index -> resident
        pl.BlockSpec((1, N), lambda i: (0, 0)),
    ]
    args = [a, w, b.reshape(1, N)]
    if add is not None:
        in_specs.append(pl.BlockSpec((tm, N), lambda i: (i, 0)))
        args.append(add)
    return pl.pallas_call(
        kern,
        out_shape=jax.ShapeDtypeStruct((M, N), a.dtype),
        grid=grid,
        in_specs=in_specs,
        out_specs=pl.BlockSpec((tm, N), lambda i: (i, 0)),
        compiler_params=pltpu.CompilerParams(
            dimension_semantics=("parallel",),
            vmem_limit_bytes=_VMEM_LIMIT),
    )(*args)


def conv3d_3x3x3(x_cl, w_taps, b, *, bcast_add=None, row_add=None, depth_tile=4):
    """x_cl: (N, D, H, W, Cin) channels-last.  w_taps: (3, 9, Cin, Cout) bf16.
    bcast_add: (N, Cout) t_emb broadcast add.  row_add: (N, D, H*W, Cout)
    residual add.  Returns (N, D, H, W, Cout)."""
    N, D, H, W, Cin = x_cl.shape
    Cout = w_taps.shape[-1]
    # TODO(synk): fuse this pad into the producing GN/SiLU kernel (write into
    # the interior of a pre-padded buffer) to avoid the extra HBM copy.
    xp = jnp.pad(x_cl, ((0, 0), (1, 1), (1, 1), (1, 1), (0, 0)))
    Hp, Wp = H + 2, W + 2
    td = _largest_divisor(D, depth_tile)
    nd = D // td

    in_specs = [
        # main depth block (td output depths) + two 1-depth halo slabs:
        pl.BlockSpec((None, td, Hp, Wp, Cin), lambda n, dt: (n, dt, 0, 0, 0)),
        pl.BlockSpec((None, None, Hp, Wp, Cin),
                     lambda n, dt: (n, dt * td + td, 0, 0, 0)),
        pl.BlockSpec((None, None, Hp, Wp, Cin),
                     lambda n, dt: (n, dt * td + td + 1, 0, 0, 0)),
        # full weight tensor, constant block index -> DMA'd once, VMEM resident
        pl.BlockSpec((3, 9, Cin, Cout), lambda n, dt: (0, 0, 0, 0)),
        pl.BlockSpec((1, Cout), lambda n, dt: (0, 0)),
    ]
    args = [xp, xp, xp, w_taps, b.reshape(1, Cout)]
    add_mode = "none"
    if row_add is not None:
        add_mode = "row"
        in_specs.append(pl.BlockSpec((None, td, H * W, Cout),
                                     lambda n, dt: (n, dt, 0, 0)))
        args.append(row_add)
    elif bcast_add is not None:
        add_mode = "bcast"
        in_specs.append(pl.BlockSpec((1, Cout), lambda n, dt: (n, 0)))
        args.append(bcast_add)

    kern = functools.partial(_conv3d_kernel, H=H, W=W, td=td,
                             add_mode=add_mode, mm_dtype=_MM_DTYPE)
    out = pl.pallas_call(
        kern,
        out_shape=jax.ShapeDtypeStruct((N, D, H * W, Cout), x_cl.dtype),
        grid=(N, nd),
        in_specs=in_specs,
        out_specs=pl.BlockSpec((None, td, H * W, Cout),
                               lambda n, dt: (n, dt, 0, 0)),
        compiler_params=pltpu.CompilerParams(
            dimension_semantics=("parallel", "parallel"),
            vmem_limit_bytes=_VMEM_LIMIT),
    )(*args)
    return out.reshape(N, D, H, W, Cout)


def group_norm_cl(x_bsc, gamma, beta, num_groups, eps=1e-5, silu=False,
                  s_tile=1024):
    """Two-pass tiled channels-last GroupNorm: x (B, S, C)."""
    B, S, C = x_bsc.shape
    G = num_groups
    Cg = C // G
    ts = S if S <= s_tile else s_tile
    ns = pl.cdiv(S, ts)
    grp = jnp.repeat(jnp.arange(G), Cg)
    cg = jax.nn.one_hot(grp, G, dtype=jnp.float32)             # (C, G)
    gc = cg.T                                                  # (G, C)

    stats = pl.pallas_call(
        functools.partial(_gn_stats_kernel, s_total=S, ts=ts),
        out_shape=jax.ShapeDtypeStruct((B, 2, G), jnp.float32),
        grid=(B, ns),
        in_specs=[pl.BlockSpec((None, ts, C), lambda b, s: (b, s, 0)),
                  pl.BlockSpec((C, G), lambda b, s: (0, 0))],
        out_specs=pl.BlockSpec((None, 2, G), lambda b, s: (b, 0, 0)),
        scratch_shapes=[pltpu.VMEM((2, G), jnp.float32)],
        compiler_params=pltpu.CompilerParams(
            dimension_semantics=("parallel", "arbitrary"),
            vmem_limit_bytes=_VMEM_LIMIT),
    )(x_bsc, cg)

    return pl.pallas_call(
        functools.partial(_gn_apply_kernel, eps=eps, silu=silu,
                          inv_count=1.0 / float(S * Cg)),
        out_shape=jax.ShapeDtypeStruct((B, S, C), x_bsc.dtype),
        grid=(B, ns),
        in_specs=[pl.BlockSpec((None, ts, C), lambda b, s: (b, s, 0)),
                  pl.BlockSpec((None, 2, G), lambda b, s: (b, 0, 0)),
                  pl.BlockSpec((G, C), lambda b, s: (0, 0)),
                  pl.BlockSpec((1, C), lambda b, s: (0, 0)),
                  pl.BlockSpec((1, C), lambda b, s: (0, 0))],
        out_specs=pl.BlockSpec((None, ts, C), lambda b, s: (b, s, 0)),
        compiler_params=pltpu.CompilerParams(
            dimension_semantics=("parallel", "parallel"),
            vmem_limit_bytes=_VMEM_LIMIT),
    )(x_bsc, stats, gc, gamma.reshape(1, C), beta.reshape(1, C))


def flash_mha(q, k, v, num_heads, *, q_tile=256, k_tile=256):
    """q: (B, Sq, C); k, v: (B, Sk, C).  All heads packed per block.
    (On v5e prefer k_tile=128; 256 fills the v6e/v7x 256-wide MXU.)"""
    B, Sq, C = q.shape
    Sk = k.shape[1]
    Dh = C // num_heads
    tq = Sq if Sq <= q_tile else q_tile
    tk = Sk if Sk <= k_tile else k_tile
    scale = 1.0 / math.sqrt(Dh)
    kern = functools.partial(_mha_flash_kernel, num_heads=num_heads,
                             head_dim=Dh, scale=scale, sk_total=Sk, tk=tk,
                             mm_dtype=_MM_DTYPE)
    return pl.pallas_call(
        kern,
        out_shape=jax.ShapeDtypeStruct((B, Sq, C), q.dtype),
        grid=(B, pl.cdiv(Sq, tq), pl.cdiv(Sk, tk)),
        in_specs=[
            pl.BlockSpec((None, tq, C), lambda b, qi, ki: (b, qi, 0)),
            pl.BlockSpec((None, tk, C), lambda b, qi, ki: (b, ki, 0)),
            pl.BlockSpec((None, tk, C), lambda b, qi, ki: (b, ki, 0)),
        ],
        out_specs=pl.BlockSpec((None, tq, C), lambda b, qi, ki: (b, qi, 0)),
        scratch_shapes=[
            pltpu.VMEM((num_heads, tq, 1), jnp.float32),    # running max
            pltpu.VMEM((num_heads, tq, 1), jnp.float32),    # running sum
            pltpu.VMEM((num_heads, tq, Dh), jnp.float32),   # output accumulator
        ],
        compiler_params=pltpu.CompilerParams(
            dimension_semantics=("parallel", "parallel", "arbitrary"),
            vmem_limit_bytes=_VMEM_LIMIT),
    )(q, k, v)


# ---------------------------------------------------------------------------
# Parameter init (deterministic, synthetic)
# ---------------------------------------------------------------------------
def init_params(key, in_ch, out_ch, t_emb_dim, num_layers, cross_attn,
                context_dim):
    keys = iter(jax.random.split(key, 512))

    def nk():
        return next(keys)

    def lin(fi, fo):
        w = (jax.random.normal(nk(), (fi, fo), jnp.float32) * 0.05
             ).astype(_WEIGHT_DTYPE)
        b = jax.random.normal(nk(), (fo,), jnp.float32) * 0.05
        return w, b

    def conv3(fi, fo):
        w = jax.random.normal(nk(), (3, 3, 3, fi, fo), jnp.float32) * 0.05
        b = jax.random.normal(nk(), (fo,), jnp.float32) * 0.05
        return w.reshape(3, 9, fi, fo).astype(_WEIGHT_DTYPE), b

    def gn(c):
        return jnp.ones((c,), jnp.float32), jnp.zeros((c,), jnp.float32)

    def mha(c):
        # TODO(synk): real torch MHA stores in_proj_weight as (3C, C) applied
        # as x @ W^T; transpose/slice accordingly when importing real weights.
        w_in, b_in = lin(c, 3 * c)
        w_out, b_out = lin(c, c)
        return (w_in, b_in, w_out, b_out)

    params = {
        "resnet_first": [], "resnet_second": [], "residual": [], "t_emb": [],
        "attn_norm": [], "attn": [],
        "cross_norm": [], "cross_attn": [], "context_proj": [],
    }
    for i in range(num_layers + 1):
        ci = in_ch if i == 0 else out_ch
        g1, b1 = gn(ci)
        cw1, cb1 = conv3(ci, out_ch)
        params["resnet_first"].append(
            dict(gn_gamma=g1, gn_beta=b1, conv_w=cw1, conv_b=cb1))
        g2, b2 = gn(out_ch)
        cw2, cb2 = conv3(out_ch, out_ch)
        params["resnet_second"].append(
            dict(gn_gamma=g2, gn_beta=b2, conv_w=cw2, conv_b=cb2))
        params["residual"].append(lin(ci, out_ch))
        if t_emb_dim is not None:
            params["t_emb"].append(lin(t_emb_dim, out_ch))
    for _ in range(num_layers):
        params["attn_norm"].append(gn(out_ch))
        params["attn"].append(mha(out_ch))
        if cross_attn:
            params["cross_norm"].append(gn(out_ch))
            params["cross_attn"].append(mha(out_ch))
            params["context_proj"].append(lin(context_dim, out_ch))
    return params


# ---------------------------------------------------------------------------
# MidBlock3D forward (matches the PyTorch module semantics)
# ---------------------------------------------------------------------------
def midblock3d_forward(params, x, t_emb=None, context=None, *,
                       num_layers, num_heads, norm_channels,
                       cross_attn=False, context_dim=None, t_emb_dim=None):
    B, _, T, H, W = x.shape
    S = T * H * W
    # single layout conversion NCDHW -> channels-last
    h_cl = jnp.transpose(x, (0, 2, 3, 4, 1))          # (B, T, H, W, Cin)

    def resnet_block(i, h):                            # h: (B, T, H, W, Ci)
        Ci = h.shape[-1]
        p1 = params["resnet_first"][i]
        p2 = params["resnet_second"][i]
        Cout = p2["conv_b"].shape[0]
        resnet_input_flat = h.reshape(B * S, Ci)

        g = group_norm_cl(h.reshape(B, S, Ci), p1["gn_gamma"], p1["gn_beta"],
                          norm_channels, silu=True).reshape(B, T, H, W, Ci)
        te = None
        if t_emb_dim is not None:
            tw, tb = params["t_emb"][i]
            te = linear(t_emb, tw, tb, silu_in=True)   # (B, Cout)
        # t_emb broadcast add fused into the conv epilogue
        h1 = conv3d_3x3x3(g, p1["conv_w"], p1["conv_b"], bcast_add=te)

        g2 = group_norm_cl(h1.reshape(B, S, Cout), p2["gn_gamma"],
                           p2["gn_beta"], norm_channels,
                           silu=True).reshape(B, T, H, W, Cout)
        # 1x1x1 residual conv is a plain matmul in channels-last; its result
        # is added inside the second conv's epilogue.
        rw, rb = params["residual"][i]
        res = linear(resnet_input_flat, rw, rb).reshape(B, T, H * W, Cout)
        return conv3d_3x3x3(g2, p2["conv_w"], p2["conv_b"], row_add=res)

    out = resnet_block(0, h_cl)
    C = out.shape[-1]
    for i in range(num_layers):
        # -------- self attention --------
        flat = out.reshape(B, S, C)
        ag, ab = params["attn_norm"][i]
        normed = group_norm_cl(flat, ag, ab, norm_channels, silu=False)
        w_in, b_in, w_out, b_out = params["attn"][i]
        qkv = linear(normed.reshape(B * S, C), w_in, b_in)        # fused QKV
        q = qkv[:, 0 * C:1 * C].reshape(B, S, C)
        k = qkv[:, 1 * C:2 * C].reshape(B, S, C)
        v = qkv[:, 2 * C:3 * C].reshape(B, S, C)
        attn = flash_mha(q, k, v, num_heads)                      # (B, S, C)
        # out-projection with the residual add fused in the epilogue
        out = linear(attn.reshape(B * S, C), w_out, b_out,
                     add=flat.reshape(B * S, C)).reshape(B, T, H, W, C)

        # -------- cross attention --------
        if cross_attn:
            flat = out.reshape(B, S, C)
            cg_, cb_ = params["cross_norm"][i]
            normed = group_norm_cl(flat, cg_, cb_, norm_channels, silu=False)
            cw, cbias = params["context_proj"][i]
            Lc = context.shape[1]
            ctx = linear(context.reshape(B * Lc, context_dim), cw, cbias)
            w_in, b_in, w_out, b_out = params["cross_attn"][i]
            q = linear(normed.reshape(B * S, C),
                       w_in[:, 0:C], b_in[0:C]).reshape(B, S, C)
            kv = linear(ctx, w_in[:, C:3 * C], b_in[C:3 * C])     # fused KV
            k = kv[:, 0:C].reshape(B, Lc, C)
            v = kv[:, C:2 * C].reshape(B, Lc, C)
            attn = flash_mha(q, k, v, num_heads)
            out = linear(attn.reshape(B * S, C), w_out, b_out,
                         add=flat.reshape(B * S, C)).reshape(B, T, H, W, C)

        out = resnet_block(i + 1, out)

    return jnp.transpose(out, (0, 4, 1, 2, 3))        # back to NCDHW


# ---------------------------------------------------------------------------
if __name__ == "__main__":
    B, in_ch, out_ch = 2, 8, 8
    T, H, W = 4, 8, 8
    t_emb_dim = 16
    num_heads = 2
    num_layers = 1
    norm_channels = 4          # num_groups for GroupNorm
    cross_attn = True
    context_dim = 16
    Lc = 8                     # context sequence length

    key = jax.random.PRNGKey(0)
    kx, kt, kc, kp = jax.random.split(key, 4)
    x = jax.random.normal(kx, (B, in_ch, T, H, W), jnp.float32)
    t_emb = jax.random.normal(kt, (B, t_emb_dim), jnp.float32)
    context = jax.random.normal(kc, (B, Lc, context_dim), jnp.float32)

    params = init_params(kp, in_ch, out_ch, t_emb_dim, num_layers,
                         cross_attn, context_dim)

    out = midblock3d_forward(
        params, x, t_emb, context,
        num_layers=num_layers, num_heads=num_heads,
        norm_channels=norm_channels, cross_attn=cross_attn,
        context_dim=context_dim, t_emb_dim=t_emb_dim)
    out = jax.block_until_ready(out)
    assert out.shape == (B, out_ch, T, H, W)
    print("KERNEL_OK")
</pallas_src>

<mosaic_0001>
module attributes {stable_mosaic.version = 11 : i64} {
  func.func @_gn_stats_kernel(%arg0: i32, %arg1: i32, %arg2: memref<1x256x8xf32, #tpu.memory_space<vmem>>, %arg3: memref<8x4xf32, #tpu.memory_space<vmem>>, %arg4: memref<1x2x4xf32, #tpu.memory_space<vmem>>, %arg5: memref<2x4xf32, #tpu.memory_space<vmem>>) attributes {dimension_semantics = [#tpu.dimension_semantics<parallel>, #tpu.dimension_semantics<arbitrary>], iteration_bounds = array<i64: 2, 1>, scalar_prefetch = 0 : i64, scratch_operands = 1 : i64, tpu.core_type = #tpu.core_type<tc>, window_params = [{transform_indices = @transform_0, window_bounds = array<i64: 1, 256, 8>}, {pipeline_mode = #tpu.pipeline_mode<synchronous>, transform_indices = @transform_1, window_bounds = array<i64: 8, 4>}, {transform_indices = @transform_2, window_bounds = array<i64: 1, 2, 4>}]} {
    %c0_i32 = arith.constant 0 : i32
    %0 = arith.cmpi eq, %arg1, %c0_i32 : i32
    %1 = arith.extui %0 : i1 to i32
    %c0_i32_0 = arith.constant 0 : i32
    %2 = arith.cmpi ne, %1, %c0_i32_0 : i32
    scf.if %2 {
      %cst_15 = arith.constant 0.000000e+00 : f32
      %27 = vector.broadcast %cst_15 : f32 to vector<2x4xf32>
      %c0_16 = arith.constant 0 : index
      %c0_17 = arith.constant 0 : index
      %28 = vector.load %arg5[%c0_16, %c0_17] : memref<2x4xf32, #tpu.memory_space<vmem>>, vector<2x4xf32>
      tpu.vector_store %arg5[%c0_16, %c0_17], %27 {strides = array<i32>} : memref<2x4xf32, #tpu.memory_space<vmem>>, vector<2x4xf32>,
    } else {
    }
    %c0 = arith.constant 0 : index
    %c0_1 = arith.constant 0 : index
    %c0_2 = arith.constant 0 : index
    %3 = vector.load %arg2[%c0, %c0_1, %c0_2] : memref<1x256x8xf32, #tpu.memory_space<vmem>>, vector<1x256x8xf32>
    %4 = vector.shape_cast %3 : vector<1x256x8xf32> to vector<256x8xf32>
    %c256_i32 = arith.constant 256 : i32
    %5 = arith.muli %arg1, %c256_i32 : i32
    %6 = tpu.iota {dimensions = array<i32: 0>} : vector<256x8xi32>
    %7 = vector.broadcast %5 : i32 to vector<256x8xi32>
    %8 = arith.addi %7, %6 : vector<256x8xi32>
    %c256_i32_3 = arith.constant 256 : i32
    %9 = vector.broadcast %c256_i32_3 : i32 to vector<256x8xi32>
    %10 = arith.cmpi slt, %8, %9 : vector<256x8xi32>
    %cst = arith.constant 0.000000e+00 : f32
    %11 = vector.broadcast %cst : f32 to vector<256x8xf32>
    %12 = arith.select %10, %4, %11 : vector<256x8xi1>, vector<256x8xf32>
    %cst_4 = arith.constant dense<0.000000e+00> : vector<8xf32>
    %13 = vector.multi_reduction <add>, %12, %cst_4 [0] : vector<256x8xf32> to vector<8xf32>
    %14 = vector.shape_cast %13 : vector<8xf32> to vector<1x8xf32>
    %15 = arith.mulf %12, %12 : vector<256x8xf32>
    %cst_5 = arith.constant dense<0.000000e+00> : vector<8xf32>
    %16 = vector.multi_reduction <add>, %15, %cst_5 [0] : vector<256x8xf32> to vector<8xf32>
    %17 = vector.shape_cast %16 : vector<8xf32> to vector<1x8xf32>
    %18 = tpu.concatenate %14, %17 in 0 : vector<1x8xf32>, vector<1x8xf32> -> vector<2x8xf32>
    %c0_6 = arith.constant 0 : index
    %c0_7 = arith.constant 0 : index
    %19 = vector.load %arg5[%c0_6, %c0_7] : memref<2x4xf32, #tpu.memory_space<vmem>>, vector<2x4xf32>
    %c0_8 = arith.constant 0 : index
    %c0_9 = arith.constant 0 : index
    %20 = vector.load %arg3[%c0_8, %c0_9] : memref<8x4xf32, #tpu.memory_space<vmem>>, vector<8x4xf32>
    %cst_10 = arith.constant dense<0.000000e+00> : vector<2x4xf32>
    %21 = tpu.matmul %18, %20, %cst_10 {dimension_numbers = #tpu.dot_dimension_numbers<[1], [0], [0], [1], [0, 0, 1, 1], [], []>} : vector<2x8xf32>, vector<8x4xf32>, vector<2x4xf32> -> vector<2x4xf32>
    %22 = arith.addf %19, %21 : vector<2x4xf32>
    %c0_11 = arith.constant 0 : index
    %c0_12 = arith.constant 0 : index
    %23 = vector.load %arg5[%c0_11, %c0_12] : memref<2x4xf32, #tpu.memory_space<vmem>>, vector<2x4xf32>
    tpu.vector_store %arg5[%c0_11, %c0_12], %22 {strides = array<i32>} : memref<2x4xf32, #tpu.memory_space<vmem>>, vector<2x4xf32>,
    %c0_i32_13 = arith.constant 0 : i32
    %24 = arith.cmpi eq, %arg1, %c0_i32_13 : i32
    %25 = arith.extui %24 : i1 to i32
    %c0_i32_14 = arith.constant 0 : i32
    %26 = arith.cmpi ne, %25, %c0_i32_14 : i32
    scf.if %26 {
      %c0_15 = arith.constant 0 : index
      %c0_16 = arith.constant 0 : index
      %27 = vector.load %arg5[%c0_15, %c0_16] : memref<2x4xf32, #tpu.memory_space<vmem>>, vector<2x4xf32>
      %c0_17 = arith.constant 0 : index
      %c0_18 = arith.constant 0 : index
      %c0_19 = arith.constant 0 : index
      %28 = vector.load %arg4[%c0_17, %c0_18, %c0_19] : memref<1x2x4xf32, #tpu.memory_space<vmem>>, vector<1x2x4xf32>
      %29 = vector.shape_cast %28 : vector<1x2x4xf32> to vector<2x4xf32>
      %30 = vector.shape_cast %27 : vector<2x4xf32> to vector<1x2x4xf32>
      tpu.vector_store %arg4[%c0_17, %c0_18, %c0_19], %30 {strides = array<i32>} : memref<1x2x4xf32, #tpu.memory_space<vmem>>, vector<1x2x4xf32>,
    } else {
    }
    return
  }
  func.func @transform_0(%arg0: i32, %arg1: i32) -> (i32, i32, i32) {
    %c0_i32 = arith.constant 0 : i32
    %c0_i32_0 = arith.constant 0 : i32
    return %arg0, %arg1, %c0_i32 : i32, i32, i32
  }
  func.func @transform_1(%arg0: i32, %arg1: i32) -> (i32, i32) {
    %c0_i32 = arith.constant 0 : i32
    %c0_i32_0 = arith.constant 0 : i32
    %c0_i32_1 = arith.constant 0 : i32
    return %c0_i32, %c0_i32_0 : i32, i32
  }
  func.func @transform_2(%arg0: i32, %arg1: i32) -> (i32, i32, i32) {
    %c0_i32 = arith.constant 0 : i32
    %c0_i32_0 = arith.constant 0 : i32
    %c0_i32_1 = arith.constant 0 : i32
    return %arg0, %c0_i32, %c0_i32_0 : i32, i32, i32
  }
}

</mosaic_0001>

<llo_original>
// kernel: tpu_custom_call.1
$region0: #{tpu_custom_call.1}
  #allocation0 [shape = 'u32[]', space=smem, size = 0x4, offset = 0x4, fixed_abs, tag = 'smem constant byte address 0x4 - core index']
  #allocation1 [shape = 'u32[72,128]{1,0:T(1,128)}', space=vmem, size = 0x9000, scoped, tag = 'internal scratch']
  #allocation2 [shape = 'f32[2,4]{1,0:T(2,128)}', space=vmem, size = 0x400, scoped, tag = 'scratch operand']
  %s0 = inlined_call_operand.vmem [shape: f32[2,256,8], index: 0, kind: input, shape index: {}]
  %s1 = inlined_call_operand.vmem [shape: f32[8,4], index: 1, kind: input, shape index: {}]
  %s2 = inlined_call_operand.hbm [shape: f32[2,2,4], index: 2, kind: output, shape index: {}]
  %s3 = sld [smem:[#allocation0]]
  $region49: #{tpu_custom_call.1} parent=0
    _
  %s5 = ssub.s32 1, %s3
  %s6 = scalar_select 0, %s5, %s3
  $region1: #{tpu_custom_call.1} parent=0
    #allocation3 [shape = 'u8[2048]{0}', space=vmem, size = 0x800, scoped, tag = 'output window, operand 0']
    #allocation4 [shape = 's32[2]{0}', space=sflag, size = 0x8, scoped, tag = 'scoped memory for tpu_custom_call.1']
    %7 = vsyncpa [#allocation4], 0
    %s8 = scalar_lea.sflag [#allocation4], 1
    %9 = vsyncpa %s8, 0
    loop: start=0, step=1, limit=4
    $region2: #{tpu_custom_call.1} parent=1 // loop_pre_header
      _
    $region3: #{tpu_custom_call.1} parent=1 // loop_header
      %s11 = sphi 0, %s15
      %p12 = scmp.ge.s32.totalorder %s11, 4
      %s18 = sphi 0, %s30
      %s19 = sphi 0, %s26
      %s20 = sphi 0, %s18
      %s21 = sphi 0, %s19
      %s22 = sphi 0, %s20
      %s23 = sphi 0, %s21
      %s35 = sphi 0, %s37
      %s38 = sphi 0, %s35
      %s39 = sphi 0, %s38
      %s55 = sphi 0, %s39
      %s59 = sphi 0, %s59
      %s61 = sphi 0, %s59
      %s62 = sphi 0, %s61
      %s76 = sphi 0, %s62
      %s82 = sphi 0, %s84
      %s85 = sphi 0, %s82
      %s86 = sphi 0, %s85
      %s102 = sphi 0, %s86
    $region4: #{tpu_custom_call.1} parent=1 // loop_header_branch
      %14 = sbr.rel (%p12) target = $region8
    $region5: #{tpu_custom_call.1} parent=1 // loop_body
      %s16 = ssub.s32 %s11, 1
      %s17 = ssub.s32 %s11, 2
      %s24 = sadd.s32 1, %s19
      %p25 = scmp.ge.s32.totalorder %s24, 1
      %s26 = scalar_select %p25, 0, %s24
      %s27 = sadd.s32 1, %s18
      %s28 = scalar_select %p25, %s27, %s18
      %p29 = scmp.ge.s32.totalorder %s28, 2
      %s30 = scalar_select %p29, 0, %s28
      %s31 = ssub.s32 %s18, %s30
      %s32 = ssub.s32 %s19, %s26
      %s33 = sor.u32 %s31, %s32
      %p34 = scmp.eq.s32.totalorder %s33, 0
      %s36 = sadd.s32 %s35, 1
      %s37 = scalar_select %p34, %s35, %s36
      %p40 = pneg %p34
      %p41 = scmp.eq.s32.totalorder %s11, 1
      %p42 = por %p40, %p41
      %p43 = scmp.ne.s32.totalorder %s35, %s38
      %p44 = scmp.eq.s32.totalorder %s11, 0
      %p45 = por %p43, %p44
      %p46 = scmp.ne.s32.totalorder %s35, %s38
      %p47 = scmp.eq.s32.totalorder %s16, 1
      %p48 = por %p46, %p47
      %p49 = scmp.ne.s32.totalorder %s38, %s39
      %p50 = scmp.eq.s32.totalorder %s16, 0
      %p51 = por %p49, %p50
      %p52 = scmp.ne.s32.totalorder %s38, %s39
      %p53 = scmp.eq.s32.totalorder %s17, 1
      %p54 = por %p52, %p53
      %p56 = scmp.ne.s32.totalorder %s39, %s55
      %p57 = scmp.eq.s32.totalorder %s17, 0
      %p58 = por %p56, %p57
      %s60 = sadd.s32 %s59, 1
      %p63 = scmp.eq.s32.totalorder %s11, 1
      %p64 = scmp.ne.s32.totalorder %s59, %s61
      %p65 = scmp.eq.s32.totalorder %s11, 0
      %p66 = por %p64, %p65
      %p67 = scmp.ne.s32.totalorder %s59, %s61
      %p68 = scmp.eq.s32.totalorder %s16, 1
      %p69 = por %p67, %p68
      %p70 = scmp.ne.s32.totalorder %s61, %s62
      %p71 = scmp.eq.s32.totalorder %s16, 0
      %p72 = por %p70, %p71
      %p73 = scmp.ne.s32.totalorder %s61, %s62
      %p74 = scmp.eq.s32.totalorder %s17, 1
      %p75 = por %p73, %p74
      %p77 = scmp.ne.s32.totalorder %s62, %s76
      %p78 = scmp.eq.s32.totalorder %s17, 0
      %p79 = por %p77, %p78
      %s80 = ssub.s32 %s18, %s30
      %p81 = scmp.eq.s32.totalorder %s80, 0
      %s83 = sadd.s32 %s82, 1
      %s84 = scalar_select %p81, %s82, %s83
      %p87 = pneg %p81
      %p88 = scmp.eq.s32.totalorder %s11, 1
      %p89 = por %p87, %p88
      %p90 = scmp.ne.s32.totalorder %s82, %s85
      %p91 = scmp.eq.s32.totalorder %s11, 0
      %p92 = por %p90, %p91
      %p93 = scmp.ne.s32.totalorder %s82, %s85
      %p94 = scmp.eq.s32.totalorder %s16, 1
      %p95 = por %p93, %p94
      %p96 = scmp.ne.s32.totalorder %s85, %s86
      %p97 = scmp.eq.s32.totalorder %s16, 0
      %p98 = por %p96, %p97
      %p99 = scmp.ne.s32.totalorder %s85, %s86
      %p100 = scmp.eq.s32.totalorder %s17, 1
      %p101 = por %p99, %p100
      %p103 = scmp.ne.s32.totalorder %s86, %s102
      %p104 = scmp.eq.s32.totalorder %s17, 0
      %p105 = por %p103, %p104
      %p106 = scmp.le.s32.totalorder 1, %s11
      %p107 = scmp.lt.s32.totalorder %s11, 3
      %p108 = pnand %p106, %p107
      %p109 = pneg %p108
      // Predicated region
      $region9: #{tpu_custom_call.1} parent=5 // pred_check
        _
      $region10: #{tpu_custom_call.1} parent=5 // pred_check_branch
        %111 = sbr.rel (%p108) target = $region12
      $region11: #{tpu_custom_call.1} parent=5 // pred_region
        %s112 = ssub.s32 %s11, 1
        // Predicated region
        $region13: #{tpu_custom_call.1} parent=11 // pred_check
          %p113 = pneg %p72
        $region14: #{tpu_custom_call.1} parent=11 // pred_check_branch
          %115 = sbr.rel (%p113) target = $region16
        $region15: #{tpu_custom_call.1} parent=11 // pred_region
          _
        $region16: #{tpu_custom_call.1} parent=11 // pred_fallthru
          _
      $region12: #{tpu_custom_call.1} parent=5 // pred_fallthru
        _
      %p116 = scmp.lt.s32.totalorder %s11, 2
      // Predicated region
      $region17: #{tpu_custom_call.1} parent=5 // pred_check
        %p117 = pneg %p116
      $region18: #{tpu_custom_call.1} parent=5 // pred_check_branch
        %119 = sbr.rel (%p117) target = $region20
      $region19: #{tpu_custom_call.1} parent=5 // pred_region
        // Predicated region
        $region21: #{tpu_custom_call.1} parent=19 // pred_check
          %p120 = pneg %p45
        $region22: #{tpu_custom_call.1} parent=19 // pred_check_branch
          %122 = sbr.rel (%p120) target = $region24
        $region23: #{tpu_custom_call.1} parent=19 // pred_region
          %s123 = smul.u32 32, %s19
          %p124 = scmp.lt.s32.totalorder %s18, 1
          %s125 = scalar_select %p124, %s18, 1
          %p126 = scmp.lt.s32.totalorder %s123, 31
          %s127 = scalar_select %p126, %s123, 31
          %s128 = smul.addr %s125, 32
          %s129 = sadd.s32 %s127, %s128
          %s130 = smul.addr %s129, 8
          %s131 = scalar_lea.vmem %s0, %s130
          %s132 = smul.u32 32, %s19
        $region24: #{tpu_custom_call.1} parent=19 // pred_fallthru
          _
      $region20: #{tpu_custom_call.1} parent=5 // pred_fallthru
        _
      %p133 = scmp.le.s32.totalorder 1, %s11
      %p134 = scmp.lt.s32.totalorder %s11, 3
      %p135 = pnand %p133, %p134
      %p136 = pneg %p135
      // Predicated region
      $region25: #{tpu_custom_call.1} parent=5 // pred_check
        _
      $region26: #{tpu_custom_call.1} parent=5 // pred_check_branch
        %138 = sbr.rel (%p135) target = $region28
      $region27: #{tpu_custom_call.1} parent=5 // pred_region
        %s139 = ssub.s32 %s11, 1
        %s140 = smul.u32 32, %s21
        %p141 = scmp.lt.s32.totalorder %s20, 1
        %s142 = scalar_select %p141, %s20, 1
        %p143 = scmp.lt.s32.totalorder %s140, 31
        %s144 = scalar_select %p143, %s140, 31
        %s145 = smul.addr %s142, 32
        %s146 = sadd.s32 %s144, %s145
        %s147 = smul.addr %s146, 8
        %s148 = scalar_lea.vmem %s0, %s147
        %p149 = pneg %p51
        %p150 = pneg %p48
        %p151 = pneg %p72
        %p152 = pneg %p69
        %p153 = pneg %p98
        %p154 = pneg %p95
        %s155 = sand.u32 %s85, 1
        %s156 = scalar_lea.sflag [#allocation4], %s155
        %s157 = sand.u32 %s85, 1
        %s158 = smul.addr %s157, 2
        %s159 = scalar_lea.vmem [#allocation3], %s158
        %s160 = smul.u32 32, %s21
        %p161 = scmp.lt.s32.totalorder %s20, 1
        %s162 = scalar_select %p161, %s20, 1
        %p163 = scmp.lt.s32.totalorder %s160, 31
        %s164 = scalar_select %p163, %s160, 31
        %s165 = smul.addr %s162, 32
        %s166 = sadd.s32 %s164, %s165
        %s167 = smul.addr %s166, 8
        %s168 = scalar_lea.vmem %s0, %s167
        %s169 = smul.u32 32, %s21
        %p170 = scmp.eq.s32.totalorder %s21, 0
        // Predicated region
        $region29: #{tpu_custom_call.1} parent=27 // pred_check
          %p171 = pneg %p170
        $region30: #{tpu_custom_call.1} parent=27 // pred_check_branch
          %173 = sbr.rel (%p171) target = $region32
        $region31: #{tpu_custom_call.1} parent=27 // pred_region
          %vm174 = vcmask 25600
          %175 = vst.msk [vmem:[#allocation2] sm:$0x3] %vm174, 0.0
        $region32: #{tpu_custom_call.1} parent=27 // pred_fallthru
          _
        %v176 = vld [vmem:[%s168] sm:$0xff]
        %v177 = vld [vmem:[%s168 + $0x8] sm:$0xff]
        %v178 = vld [vmem:[%s168 + $0x10] sm:$0xff]
        %v179 = vld [vmem:[%s168 + $0x18] sm:$0xff]
        %v180 = vld [vmem:[%s168 + $0x20] sm:$0xff]
        %v181 = vld [vmem:[%s168 + $0x28] sm:$0xff]
        %v182 = vld [vmem:[%s168 + $0x30] sm:$0xff]
        %v183 = vld [vmem:[%s168 + $0x38] sm:$0xff]
        %v184 = vld [vmem:[%s168 + $0x40] sm:$0xff]
        %v185 = vld [vmem:[%s168 + $0x48] sm:$0xff]
        %v186 = vld [vmem:[%s168 + $0x50] sm:$0xff]
        %v187 = vld [vmem:[%s168 + $0x58] sm:$0xff]
        %v188 = vld [vmem:[%s168 + $0x60] sm:$0xff]
        %v189 = vld [vmem:[%s168 + $0x68] sm:$0xff]
        %v190 = vld [vmem:[%s168 + $0x70] sm:$0xff]
        %v191 = vld [vmem:[%s168 + $0x78] sm:$0xff]
        %v192 = vld [vmem:[%s168 + $0x80] sm:$0xff]
        %v193 = vld [vmem:[%s168 + $0x88] sm:$0xff]
        %v194 = vld [vmem:[%s168 + $0x90] sm:$0xff]
        %v195 = vld [vmem:[%s168 + $0x98] sm:$0xff]
        %v196 = vld [vmem:[%s168 + $0xa0] sm:$0xff]
        %v197 = vld [vmem:[%s168 + $0xa8] sm:$0xff]
        %v198 = vld [vmem:[%s168 + $0xb0] sm:$0xff]
        %v199 = vld [vmem:[%s168 + $0xb8] sm:$0xff]
        %v200 = vld [vmem:[%s168 + $0xc0] sm:$0xff]
        %v201 = vld [vmem:[%s168 + $0xc8] sm:$0xff]
        %v202 = vld [vmem:[%s168 + $0xd0] sm:$0xff]
        %v203 = vld [vmem:[%s168 + $0xd8] sm:$0xff]
        %v204 = vld [vmem:[%s168 + $0xe0] sm:$0xff]
        %v205 = vld [vmem:[%s168 + $0xe8] sm:$0xff]
        %v206 = vld [vmem:[%s168 + $0xf0] sm:$0xff]
        %v207 = vld [vmem:[%s168 + $0xf8] sm:$0xff]
        %s208 = smul.u32 %s21, 256
        %v209 = vlaneseq
        %v210 = vshrl.u32 %v209, 7
        %v211 = vadd.s32 %v210, 8
        %v212 = vadd.s32 %v210, 16
        %v213 = vadd.s32 %v210, 24
        %v214 = vadd.s32 %v210, 32
        %v215 = vadd.s32 %v210, 40
        %v216 = vadd.s32 %v210, 48
        %v217 = vadd.s32 %v210, 56
        %v218 = vadd.s32 %v210, 64
        %v219 = vadd.s32 %v210, 72
        %v220 = vadd.s32 %v210, 80
        %v221 = vadd.s32 %v210, 88
        %v222 = vadd.s32 %v210, 96
        %v223 = vadd.s32 %v210, 104
        %v224 = vadd.s32 %v210, 112
        %v225 = vadd.s32 %v210, 120
        %v226 = vadd.s32 %v210, 128
        %v227 = vadd.s32 %v210, 136
        %v228 = vadd.s32 %v210, 144
        %v229 = vadd.s32 %v210, 152
        %v230 = vadd.s32 %v210, 160
        %v231 = vadd.s32 %v210, 168
        %v232 = vadd.s32 %v210, 176
        %v233 = vadd.s32 %v210, 184
        %v234 = vadd.s32 %v210, 192
        %v235 = vadd.s32 %v210, 200
        %v236 = vadd.s32 %v210, 208
        %v237 = vadd.s32 %v210, 216
        %v238 = vadd.s32 %v210, 224
        %v239 = vadd.s32 %v210, 232
        %v240 = vadd.s32 %v210, 240
        %v241 = vadd.s32 %v210, 248
        %v242 = vstv %s208
        %v243 = vadd.s32 %v242, %v210
        %v244 = vadd.s32 %v242, %v211
        %v245 = vadd.s32 %v242, %v212
        %v246 = vadd.s32 %v242, %v213
        %v247 = vadd.s32 %v242, %v214
        %v248 = vadd.s32 %v242, %v215
        %v249 = vadd.s32 %v242, %v216
        %v250 = vadd.s32 %v242, %v217
        %v251 = vadd.s32 %v242, %v218
        %v252 = vadd.s32 %v242, %v219
        %v253 = vadd.s32 %v242, %v220
        %v254 = vadd.s32 %v242, %v221
        %v255 = vadd.s32 %v242, %v222
        %v256 = vadd.s32 %v242, %v223
        %v257 = vadd.s32 %v242, %v224
        %v258 = vadd.s32 %v242, %v225
        %v259 = vadd.s32 %v242, %v226
        %v260 = vadd.s32 %v242, %v227
        %v261 = vadd.s32 %v242, %v228
        %v262 = vadd.s32 %v242, %v229
        %v263 = vadd.s32 %v242, %v230
        %v264 = vadd.s32 %v242, %v231
        %v265 = vadd.s32 %v242, %v232
        %v266 = vadd.s32 %v242, %v233
        %v267 = vadd.s32 %v242, %v234
        %v268 = vadd.s32 %v242, %v235
        %v269 = vadd.s32 %v242, %v236
        %v270 = vadd.s32 %v242, %v237
        %v271 = vadd.s32 %v242, %v238
        %v272 = vadd.s32 %v242, %v239
        %v273 = vadd.s32 %v242, %v240
        %v274 = vadd.s32 %v242, %v241
        %vm275 = vcmp.lt.s32.totalorder %v243, 256
        %vm276 = vcmp.lt.s32.totalorder %v244, 256
        %vm277 = vcmp.lt.s32.totalorder %v245, 256
        %vm278 = vcmp.lt.s32.totalorder %v246, 256
        %vm279 = vcmp.lt.s32.totalorder %v247, 256
        %vm280 = vcmp.lt.s32.totalorder %v248, 256
        %vm281 = vcmp.lt.s32.totalorder %v249, 256
        %vm282 = vcmp.lt.s32.totalorder %v250, 256
        %vm283 = vcmp.lt.s32.totalorder %v251, 256
        %vm284 = vcmp.lt.s32.totalorder %v252, 256
        %vm285 = vcmp.lt.s32.totalorder %v253, 256
        %vm286 = vcmp.lt.s32.totalorder %v254, 256
        %vm287 = vcmp.lt.s32.totalorder %v255, 256
        %vm288 = vcmp.lt.s32.totalorder %v256, 256
        %vm289 = vcmp.lt.s32.totalorder %v257, 256
        %vm290 = vcmp.lt.s32.totalorder %v258, 256
        %vm291 = vcmp.lt.s32.totalorder %v259, 256
        %vm292 = vcmp.lt.s32.totalorder %v260, 256
        %vm293 = vcmp.lt.s32.totalorder %v261, 256
        %vm294 = vcmp.lt.s32.totalorder %v262, 256
        %vm295 = vcmp.lt.s32.totalorder %v263, 256
        %vm296 = vcmp.lt.s32.totalorder %v264, 256
        %vm297 = vcmp.lt.s32.totalorder %v265, 256
        %vm298 = vcmp.lt.s32.totalorder %v266, 256
        %vm299 = vcmp.lt.s32.totalorder %v267, 256
        %vm300 = vcmp.lt.s32.totalorder %v268, 256
        %vm301 = vcmp.lt.s32.totalorder %v269, 256
        %vm302 = vcmp.lt.s32.totalorder %v270, 256
        %vm303 = vcmp.lt.s32.totalorder %v271, 256
        %vm304 = vcmp.lt.s32.totalorder %v272, 256
        %vm305 = vcmp.lt.s32.totalorder %v273, 256
        %vm306 = vcmp.lt.s32.totalorder %v274, 256
        %v307 = vsel %vm275, %v176, 0.0
        %v308 = vsel %vm276, %v177, 0.0
        %v309 = vsel %vm277, %v178, 0.0
        %v310 = vsel %vm278, %v179, 0.0
        %v311 = vsel %vm279, %v180, 0.0
        %v312 = vsel %vm280, %v181, 0.0
        %v313 = vsel %vm281, %v182, 0.0
        %v314 = vsel %vm282, %v183, 0.0
        %v315 = vsel %vm283, %v184, 0.0
        %v316 = vsel %vm284, %v185, 0.0
        %v317 = vsel %vm285, %v186, 0.0
        %v318 = vsel %vm286, %v187, 0.0
        %v319 = vsel %vm287, %v188, 0.0
        %v320 = vsel %vm288, %v189, 0.0
        %v321 = vsel %vm289, %v190, 0.0
        %v322 = vsel %vm290, %v191, 0.0
        %v323 = vsel %vm291, %v192, 0.0
        %v324 = vsel %vm292, %v193, 0.0
        %v325 = vsel %vm293, %v194, 0.0
        %v326 = vsel %vm294, %v195, 0.0
        %v327 = vsel %vm295, %v196, 0.0
        %v328 = vsel %vm296, %v197, 0.0
        %v329 = vsel %vm297, %v198, 0.0
        %v330 = vsel %vm298, %v199, 0.0
        %v331 = vsel %vm299, %v200, 0.0
        %v332 = vsel %vm300, %v201, 0.0
        %v333 = vsel %vm301, %v202, 0.0
        %v334 = vsel %vm302, %v203, 0.0
        %v335 = vsel %vm303, %v204, 0.0
        %v336 = vsel %vm304, %v205, 0.0
        %v337 = vsel %vm305, %v206, 0.0
        %v338 = vsel %vm306, %v207, 0.0
        %vm339 = vcmask 64512
        %v340 = vsel %vm339, %v307, 0.0
        %v341 = vsel %vm339, %v308, 0.0
        %v342 = vadd.f32 %v340, %v341
        %v343 = vsel %vm339, %v309, 0.0
        %v344 = vadd.f32 %v342, %v343
        %v345 = vsel %vm339, %v310, 0.0
        %v346 = vadd.f32 %v344, %v345
        %v347 = vsel %vm339, %v311, 0.0
        %v348 = vadd.f32 %v346, %v347
        %v349 = vsel %vm339, %v312, 0.0
        %v350 = vadd.f32 %v348, %v349
        %v351 = vsel %vm339, %v313, 0.0
        %v352 = vadd.f32 %v350, %v351
        %v353 = vsel %vm339, %v314, 0.0
        %v354 = vadd.f32 %v352, %v353
        %v355 = vsel %vm339, %v315, 0.0
        %v356 = vadd.f32 %v354, %v355
        %v357 = vsel %vm339, %v316, 0.0
        %v358 = vadd.f32 %v356, %v357
        %v359 = vsel %vm339, %v317, 0.0
        %v360 = vadd.f32 %v358, %v359
        %v361 = vsel %vm339, %v318, 0.0
        %v362 = vadd.f32 %v360, %v361
        %v363 = vsel %vm339, %v319, 0.0
        %v364 = vadd.f32 %v362, %v363
        %v365 = vsel %vm339, %v320, 0.0
        %v366 = vadd.f32 %v364, %v365
        %v367 = vsel %vm339, %v321, 0.0
        %v368 = vadd.f32 %v366, %v367
        %v369 = vsel %vm339, %v322, 0.0
        %v370 = vadd.f32 %v368, %v369
        %v371 = vsel %vm339, %v323, 0.0
        %v372 = vadd.f32 %v370, %v371
        %v373 = vsel %vm339, %v324, 0.0
        %v374 = vadd.f32 %v372, %v373
        %v375 = vsel %vm339, %v325, 0.0
        %v376 = vadd.f32 %v374, %v375
        %v377 = vsel %vm339, %v326, 0.0
        %v378 = vadd.f32 %v376, %v377
        %v379 = vsel %vm339, %v327, 0.0
        %v380 = vadd.f32 %v378, %v379
        %v381 = vsel %vm339, %v328, 0.0
        %v382 = vadd.f32 %v380, %v381
        %v383 = vsel %vm339, %v329, 0.0
        %v384 = vadd.f32 %v382, %v383
        %v385 = vsel %vm339, %v330, 0.0
        %v386 = vadd.f32 %v384, %v385
        %v387 = vsel %vm339, %v331, 0.0
        %v388 = vadd.f32 %v386, %v387
        %v389 = vsel %vm339, %v332, 0.0
        %v390 = vadd.f32 %v388, %v389
        %v391 = vsel %vm339, %v333, 0.0
        %v392 = vadd.f32 %v390, %v391
        %v393 = vsel %vm339, %v334, 0.0
        %v394 = vadd.f32 %v392, %v393
        %v395 = vsel %vm339, %v335, 0.0
        %v396 = vadd.f32 %v394, %v395
        %v397 = vsel %vm339, %v336, 0.0
        %v398 = vadd.f32 %v396, %v397
        %v399 = vsel %vm339, %v337, 0.0
        %v400 = vadd.f32 %v398, %v399
        %v401 = vsel %vm339, %v338, 0.0
        %v402 = vadd.f32 %v400, %v401
        %v403 = vrot.slane %v402, 4
        %v404 = vadd.f32 %v402, %v403
        %v405 = vrot.slane %v404, 2
        %v406 = vadd.f32 %v404, %v405
        %v407 = vrot.slane %v406, 1
        %v408 = vadd.f32 %v406, %v407
        %v409 = vmul.f32 %v307, %v307
        %v410 = vmul.f32 %v308, %v308
        %v411 = vmul.f32 %v309, %v309
        %v412 = vmul.f32 %v310, %v310
        %v413 = vmul.f32 %v311, %v311
        %v414 = vmul.f32 %v312, %v312
        %v415 = vmul.f32 %v313, %v313
        %v416 = vmul.f32 %v314, %v314
        %v417 = vmul.f32 %v315, %v315
        %v418 = vmul.f32 %v316, %v316
        %v419 = vmul.f32 %v317, %v317
        %v420 = vmul.f32 %v318, %v318
        %v421 = vmul.f32 %v319, %v319
        %v422 = vmul.f32 %v320, %v320
        %v423 = vmul.f32 %v321, %v321
        %v424 = vmul.f32 %v322, %v322
        %v425 = vmul.f32 %v323, %v323
        %v426 = vmul.f32 %v324, %v324
        %v427 = vmul.f32 %v325, %v325
        %v428 = vmul.f32 %v326, %v326
        %v429 = vmul.f32 %v327, %v327
        %v430 = vmul.f32 %v328, %v328
        %v431 = vmul.f32 %v329, %v329
        %v432 = vmul.f32 %v330, %v330
        %v433 = vmul.f32 %v331, %v331
        %v434 = vmul.f32 %v332, %v332
        %v435 = vmul.f32 %v333, %v333
        %v436 = vmul.f32 %v334, %v334
        %v437 = vmul.f32 %v335, %v335
        %v438 = vmul.f32 %v336, %v336
        %v439 = vmul.f32 %v337, %v337
        %v440 = vmul.f32 %v338, %v338
        %v441 = vsel %vm339, %v409, 0.0
        %v442 = vsel %vm339, %v410, 0.0
        %v443 = vadd.f32 %v441, %v442
        %v444 = vsel %vm339, %v411, 0.0
        %v445 = vadd.f32 %v443, %v444
        %v446 = vsel %vm339, %v412, 0.0
        %v447 = vadd.f32 %v445, %v446
        %v448 = vsel %vm339, %v413, 0.0
        %v449 = vadd.f32 %v447, %v448
        %v450 = vsel %vm339, %v414, 0.0
        %v451 = vadd.f32 %v449, %v450
        %v452 = vsel %vm339, %v415, 0.0
        %v453 = vadd.f32 %v451, %v452
        %v454 = vsel %vm339, %v416, 0.0
        %v455 = vadd.f32 %v453, %v454
        %v456 = vsel %vm339, %v417, 0.0
        %v457 = vadd.f32 %v455, %v456
        %v458 = vsel %vm339, %v418, 0.0
        %v459 = vadd.f32 %v457, %v458
        %v460 = vsel %vm339, %v419, 0.0
        %v461 = vadd.f32 %v459, %v460
        %v462 = vsel %vm339, %v420, 0.0
        %v463 = vadd.f32 %v461, %v462
        %v464 = vsel %vm339, %v421, 0.0
        %v465 = vadd.f32 %v463, %v464
        %v466 = vsel %vm339, %v422, 0.0
        %v467 = vadd.f32 %v465, %v466
        %v468 = vsel %vm339, %v423, 0.0
        %v469 = vadd.f32 %v467, %v468
        %v470 = vsel %vm339, %v424, 0.0
        %v471 = vadd.f32 %v469, %v470
        %v472 = vsel %vm339, %v425, 0.0
        %v473 = vadd.f32 %v471, %v472
        %v474 = vsel %vm339, %v426, 0.0
        %v475 = vadd.f32 %v473, %v474
        %v476 = vsel %vm339, %v427, 0.0
        %v477 = vadd.f32 %v475, %v476
        %v478 = vsel %vm339, %v428, 0.0
        %v479 = vadd.f32 %v477, %v478
        %v480 = vsel %vm339, %v429, 0.0
        %v481 = vadd.f32 %v479, %v480
        %v482 = vsel %vm339, %v430, 0.0
        %v483 = vadd.f32 %v481, %v482
        %v484 = vsel %vm339, %v431, 0.0
        %v485 = vadd.f32 %v483, %v484
        %v486 = vsel %vm339, %v432, 0.0
        %v487 = vadd.f32 %v485, %v486
        %v488 = vsel %vm339, %v433, 0.0
        %v489 = vadd.f32 %v487, %v488
        %v490 = vsel %vm339, %v434, 0.0
        %v491 = vadd.f32 %v489, %v490
        %v492 = vsel %vm339, %v435, 0.0
        %v493 = vadd.f32 %v491, %v492
        %v494 = vsel %vm339, %v436, 0.0
        %v495 = vadd.f32 %v493, %v494
        %v496 = vsel %vm339, %v437, 0.0
        %v497 = vadd.f32 %v495, %v496
        %v498 = vsel %vm339, %v438, 0.0
        %v499 = vadd.f32 %v497, %v498
        %v500 = vsel %vm339, %v439, 0.0
        %v501 = vadd.f32 %v499, %v500
        %v502 = vsel %vm339, %v440, 0.0
        %v503 = vadd.f32 %v501, %v502
        %v504 = vrot.slane %v503, 4
        %v505 = vadd.f32 %v503, %v504
        %v506 = vrot.slane %v505, 2
        %v507 = vadd.f32 %v505, %v506
        %v508 = vrot.slane %v507, 1
        %v509 = vadd.f32 %v507, %v508
        %vm510 = vcmask 1040384
        %v511 = vsel %vm510, %v408, %v509
        %v512 = vld [vmem:[#allocation2] sm:$0x3]
        %v513 = vld [vmem:[%s1] sm:$0xff]
        %v515 = vsel %vm339, %v511, 0
        %517 = vmatpush.msra.mxu0 0.0
        %518 = vmatpush.msra.mxu0 0.0
        %519 = vmatpush.msra.mxu0 0.0
        %520 = vmatpush.msra.mxu0 0.0
        %521 = vmatpush.msra.mxu0 0.0
        %522 = vmatpush.msra.mxu0 0.0
        %523 = vmatpush.msra.mxu0 0.0
        %524 = vmatpush.msra.mxu0 0.0
        %525 = vmatpush.msra.mxu0 0.0
        %526 = vmatpush.msra.mxu0 0.0
        %527 = vmatpush.msra.mxu0 0.0
        %528 = vmatpush.msra.mxu0 0.0
        %529 = vmatpush.msra.mxu0 0.0
        %530 = vmatpush.msra.mxu0 0.0
        %531 = vmatpush.msra.mxu0 0.0
        %532 = vmatpush.msra.mxu0 %v513
        %533 = vmatmul.f32.gmra.mxu0 %v515
        %v534 = vpop.f32.mrf.mxu0
        %v535 = vadd.f32 0.0, %v534
        %536 = vdwg.mxu0
        %v537 = vadd.f32 %v512, %v535
        %vm538 = vcmask 25600
        %539 = vst.msk [vmem:[#allocation2] sm:$0x3] %vm538, %v537
        // Predicated region
        $region33: #{tpu_custom_call.1} parent=27 // pred_check
          %p540 = pneg %p170
        $region34: #{tpu_custom_call.1} parent=27 // pred_check_branch
          %542 = sbr.rel (%p540) target = $region36
        $region35: #{tpu_custom_call.1} parent=27 // pred_region
          %v543 = vld [vmem:[#allocation2] sm:$0x3]
          %544 = vst.msk [vmem:[%s159] sm:$0x3] %vm538, %v543
        $region36: #{tpu_custom_call.1} parent=27 // pred_fallthru
          _
        %s545 = sand.u32 %s85, 1
        %s546 = scalar_lea.sflag [#allocation4], %s545
        %s547 = sand.u32 %s85, 1
        %s548 = smul.addr %s547, 2
        %s549 = scalar_lea.vmem [#allocation3], %s548
        // Predicated region
        $region37: #{tpu_custom_call.1} parent=27 // pred_check
          %p550 = pneg %p95
        $region38: #{tpu_custom_call.1} parent=27 // pred_check_branch
          %552 = sbr.rel (%p550) target = $region40
        $region39: #{tpu_custom_call.1} parent=27 // pred_region
          %554 = vsyncadd %s546, 0
          %s555 = smul.addr %s20, 2
          %s556 = scalar_lea.hbm %s2, %s555
          %s558 = sshll.u32 %s549, 4
          %s559 = int_to_ptr.vmem [resolvable:$true] %s558
          %s560 = sshll.u32 %s556, 4
          %s561 = int_to_ptr.hbm [resolvable:$true] %s560
          %563 = dma.vmem_to_hbm [thread:$0]  %s559, 32, %s561, %s546
        $region40: #{tpu_custom_call.1} parent=27 // pred_fallthru
          _
      $region28: #{tpu_custom_call.1} parent=5 // pred_fallthru
        _
      %p564 = scmp.le.s32.totalorder 2, %s11
      // Predicated region
      $region41: #{tpu_custom_call.1} parent=5 // pred_check
        %p565 = pneg %p564
      $region42: #{tpu_custom_call.1} parent=5 // pred_check_branch
        %567 = sbr.rel (%p565) target = $region44
      $region43: #{tpu_custom_call.1} parent=5 // pred_region
        %s568 = ssub.s32 %s11, 2
        // Predicated region
        $region45: #{tpu_custom_call.1} parent=43 // pred_check
          %p569 = pneg %p101
        $region46: #{tpu_custom_call.1} parent=43 // pred_check_branch
          %571 = sbr.rel (%p569) target = $region48
        $region47: #{tpu_custom_call.1} parent=43 // pred_region
          %s572 = sand.u32 %s86, 1
          %s573 = scalar_lea.sflag [#allocation4], %s572
          %s574 = sand.u32 %s86, 1
          %s575 = smul.addr %s574, 2
          %s576 = scalar_lea.vmem [#allocation3], %s575
          %578 = dma.done %s573, 32
        $region48: #{tpu_custom_call.1} parent=43 // pred_fallthru
          _
      $region44: #{tpu_custom_call.1} parent=5 // pred_fallthru
        _
    $region6: #{tpu_custom_call.1} parent=1 // loop_footer
      %s15 = sadd.s32 1, %s11
    $region7: #{tpu_custom_call.1} parent=1 // loop_footer_branch
      %10 = sbr.rel target = $region3
    $region8: #{tpu_custom_call.1} parent=1 // loop_exit
      _
    %579 = vsyncpa [#allocation4], 1
    %s580 = scalar_lea.sflag [#allocation4], 1
    %581 = vsyncpa %s580, 1

</llo_original>
